<compile_context>
chip_gen: v7x
topology: tpu7x:2x2x1
jax: 0.10.0
libtpu: 0.0.40
codegen_flags: <defaults>
</compile_context>

<pallas_src>
import numpy as np
import jax
import jax.numpy as jnp
from jax import lax
from jax.experimental import pallas as pl
from jax.experimental.pallas import tpu as pltpu

_C1 = 0.01 ** 2
_C2 = 0.03 ** 2


def _reflect_sum3(a, axis):
    """3-tap sum along `axis` with ReflectionPad(1) boundary semantics.

    out[i] = a[i-1] + a[i] + a[i+1], with index -1 -> 1 and index n -> n-2.
    Implemented with wrap-around rolls (XLU) plus iota/where fixes at the two
    boundary slices (VPU) -- no padding, no concatenate, no unaligned slices.
    """
    n = a.shape[axis]
    idx = lax.broadcasted_iota(jnp.int32, a.shape, axis)
    prev = pltpu.roll(a, shift=1, axis=axis)        # prev[i] = a[i-1] (wraps at i=0)
    nxt = pltpu.roll(a, shift=n - 1, axis=axis)     # nxt[i]  = a[i+1] (wraps at i=n-1)
    prev_r = jnp.where(idx == 0, nxt, prev)         # reflect: a[-1] -> a[1]
    nxt_r = jnp.where(idx == n - 1, prev, nxt)      # reflect: a[n]  -> a[n-2]
    return prev_r + a + nxt_r


def _box3(a):
    # 3x3 mean with reflect padding == separable 3-tap reflect sums / 9.
    return _reflect_sum3(_reflect_sum3(a, axis=1), axis=0) * (1.0 / 9.0)


def ssim_kernel(x_ref, y_ref, o_ref):
    # x_ref / y_ref / o_ref: (H, W) f32 blocks (one image channel per grid step).
    x = x_ref[...].astype(jnp.float32)
    y = y_ref[...].astype(jnp.float32)

    mu_x = _box3(x)
    mu_y = _box3(y)
    mu_x2 = mu_x * mu_x
    mu_y2 = mu_y * mu_y
    mu_xy = mu_x * mu_y

    sigma_x = _box3(x * x) - mu_x2
    sigma_y = _box3(y * y) - mu_y2
    sigma_xy = _box3(x * y) - mu_xy

    ssim_n = (2.0 * mu_xy + _C1) * (2.0 * sigma_xy + _C2)
    ssim_d = (mu_x2 + mu_y2 + _C1) * (sigma_x + sigma_y + _C2)
    out = jnp.clip((1.0 - ssim_n / ssim_d) * 0.5, 0.0, 1.0)
    o_ref[...] = out.astype(o_ref.dtype)


def ssim(x, y):
    """SSIM dissimilarity map, matching the PyTorch module's forward."""
    assert x.shape == y.shape
    B, C, H, W = x.shape
    BC = B * C
    xf = x.reshape(BC, H, W).astype(jnp.float32)
    yf = y.reshape(BC, H, W).astype(jnp.float32)

    # TODO(synk): for very large H*W, add an H-tiled grid axis with a 1-row
    # halo so per-step blocks stay within v7x's smaller VMEM.
    bytes_accessed = 3 * BC * H * W * 4          # read x, read y, write out
    flops = 50 * BC * H * W                      # ~per-pixel VPU ops

    out = pl.pallas_call(
        ssim_kernel,
        out_shape=jax.ShapeDtypeStruct((BC, H, W), jnp.float32),
        grid_spec=pltpu.PrefetchScalarGridSpec(
            num_scalar_prefetch=0,
            grid=(BC,),
            in_specs=[
                pl.BlockSpec((None, H, W), lambda i: (i, 0, 0)),
                pl.BlockSpec((None, H, W), lambda i: (i, 0, 0)),
            ],
            out_specs=pl.BlockSpec((None, H, W), lambda i: (i, 0, 0)),
        ),
        compiler_params=pltpu.CompilerParams(
            dimension_semantics=("parallel",)),
        cost_estimate=pl.CostEstimate(
            flops=flops, transcendentals=0, bytes_accessed=bytes_accessed),
    )(xf, yf)
    return out.reshape(B, C, H, W)


def ssim_ref(x, y):
    # Pure-JAX reference mirroring the PyTorch forward exactly.
    pad = ((0, 0), (0, 0), (1, 1), (1, 1))
    xp = jnp.pad(x, pad, mode="reflect")
    yp = jnp.pad(y, pad, mode="reflect")

    def avg_pool3(a):
        s = lax.reduce_window(a, 0.0, lax.add, (1, 1, 3, 3), (1, 1, 1, 1), "VALID")
        return s / 9.0

    mu_x = avg_pool3(xp)
    mu_y = avg_pool3(yp)
    sigma_x = avg_pool3(xp * xp) - mu_x ** 2
    sigma_y = avg_pool3(yp * yp) - mu_y ** 2
    sigma_xy = avg_pool3(xp * yp) - mu_x * mu_y
    ssim_n = (2.0 * mu_x * mu_y + _C1) * (2.0 * sigma_xy + _C2)
    ssim_d = (mu_x ** 2 + mu_y ** 2 + _C1) * (sigma_x + sigma_y + _C2)
    return jnp.clip((1.0 - ssim_n / ssim_d) * 0.5, 0.0, 1.0)


if __name__ == "__main__":
    B, C, H, W = 2, 3, 16, 128
    key = jax.random.PRNGKey(0)
    kx, ky = jax.random.split(key)

    x = jax.random.uniform(kx, (B, C, H, W), jnp.float32)
    y = jnp.clip(x + 0.1 * jax.random.normal(ky, (B, C, H, W), jnp.float32), 0.0, 1.0)

    out = ssim(x, y)
    out = jax.block_until_ready(out)

    ref = ssim_ref(x, y)
    np.testing.assert_allclose(np.asarray(out), np.asarray(ref), rtol=1e-4, atol=1e-5)

    print("KERNEL_OK")
</pallas_src>

<mosaic_0001>
module attributes {stable_mosaic.version = 11 : i64} {
  func.func @ssim_kernel(%arg0: i32, %arg1: memref<1x16x128xf32, #tpu.memory_space<vmem>>, %arg2: memref<1x16x128xf32, #tpu.memory_space<vmem>>, %arg3: memref<1x16x128xf32, #tpu.memory_space<vmem>>) attributes {dimension_semantics = [#tpu.dimension_semantics<parallel>], iteration_bounds = array<i64: 6>, scalar_prefetch = 0 : i64, scratch_operands = 0 : i64, tpu.core_type = #tpu.core_type<tc>, window_params = [{transform_indices = @transform_0, window_bounds = array<i64: 1, 16, 128>}, {transform_indices = @transform_1, window_bounds = array<i64: 1, 16, 128>}, {transform_indices = @transform_2, window_bounds = array<i64: 1, 16, 128>}]} {
    %c0 = arith.constant 0 : index
    %c0_0 = arith.constant 0 : index
    %c0_1 = arith.constant 0 : index
    %0 = vector.load %arg1[%c0, %c0_0, %c0_1] : memref<1x16x128xf32, #tpu.memory_space<vmem>>, vector<1x16x128xf32>
    %1 = vector.shape_cast %0 : vector<1x16x128xf32> to vector<16x128xf32>
    %c0_2 = arith.constant 0 : index
    %c0_3 = arith.constant 0 : index
    %c0_4 = arith.constant 0 : index
    %2 = vector.load %arg2[%c0_2, %c0_3, %c0_4] : memref<1x16x128xf32, #tpu.memory_space<vmem>>, vector<1x16x128xf32>
    %3 = vector.shape_cast %2 : vector<1x16x128xf32> to vector<16x128xf32>
    %4 = tpu.iota {dimensions = array<i32: 1>} : vector<16x128xi32>
    %c1_i32 = arith.constant 1 : i32
    %5 = tpu.dynamic_rotate %1 by %c1_i32 dim 1 : vector<16x128xf32>, i32 -> vector<16x128xf32>
    %c127_i32 = arith.constant 127 : i32
    %6 = tpu.dynamic_rotate %1 by %c127_i32 dim 1 : vector<16x128xf32>, i32 -> vector<16x128xf32>
    %c0_i32 = arith.constant 0 : i32
    %7 = vector.broadcast %c0_i32 : i32 to vector<16x128xi32>
    %8 = arith.cmpi eq, %4, %7 : vector<16x128xi32>
    %9 = arith.select %8, %6, %5 : vector<16x128xi1>, vector<16x128xf32>
    %c127_i32_5 = arith.constant 127 : i32
    %10 = vector.broadcast %c127_i32_5 : i32 to vector<16x128xi32>
    %11 = arith.cmpi eq, %4, %10 : vector<16x128xi32>
    %12 = arith.select %11, %5, %6 : vector<16x128xi1>, vector<16x128xf32>
    %13 = arith.addf %9, %1 : vector<16x128xf32>
    %14 = arith.addf %13, %12 : vector<16x128xf32>
    %15 = tpu.iota {dimensions = array<i32: 0>} : vector<16x128xi32>
    %c1_i32_6 = arith.constant 1 : i32
    %16 = tpu.dynamic_rotate %14 by %c1_i32_6 dim 0 : vector<16x128xf32>, i32 -> vector<16x128xf32>
    %c15_i32 = arith.constant 15 : i32
    %17 = tpu.dynamic_rotate %14 by %c15_i32 dim 0 : vector<16x128xf32>, i32 -> vector<16x128xf32>
    %c0_i32_7 = arith.constant 0 : i32
    %18 = vector.broadcast %c0_i32_7 : i32 to vector<16x128xi32>
    %19 = arith.cmpi eq, %15, %18 : vector<16x128xi32>
    %20 = arith.select %19, %17, %16 : vector<16x128xi1>, vector<16x128xf32>
    %c15_i32_8 = arith.constant 15 : i32
    %21 = vector.broadcast %c15_i32_8 : i32 to vector<16x128xi32>
    %22 = arith.cmpi eq, %15, %21 : vector<16x128xi32>
    %23 = arith.select %22, %16, %17 : vector<16x128xi1>, vector<16x128xf32>
    %24 = arith.addf %20, %14 : vector<16x128xf32>
    %25 = arith.addf %24, %23 : vector<16x128xf32>
    %cst = arith.constant 0.111111112 : f32
    %26 = vector.broadcast %cst : f32 to vector<16x128xf32>
    %27 = arith.mulf %25, %26 : vector<16x128xf32>
    %28 = tpu.iota {dimensions = array<i32: 1>} : vector<16x128xi32>
    %c1_i32_9 = arith.constant 1 : i32
    %29 = tpu.dynamic_rotate %3 by %c1_i32_9 dim 1 : vector<16x128xf32>, i32 -> vector<16x128xf32>
    %c127_i32_10 = arith.constant 127 : i32
    %30 = tpu.dynamic_rotate %3 by %c127_i32_10 dim 1 : vector<16x128xf32>, i32 -> vector<16x128xf32>
    %c0_i32_11 = arith.constant 0 : i32
    %31 = vector.broadcast %c0_i32_11 : i32 to vector<16x128xi32>
    %32 = arith.cmpi eq, %28, %31 : vector<16x128xi32>
    %33 = arith.select %32, %30, %29 : vector<16x128xi1>, vector<16x128xf32>
    %c127_i32_12 = arith.constant 127 : i32
    %34 = vector.broadcast %c127_i32_12 : i32 to vector<16x128xi32>
    %35 = arith.cmpi eq, %28, %34 : vector<16x128xi32>
    %36 = arith.select %35, %29, %30 : vector<16x128xi1>, vector<16x128xf32>
    %37 = arith.addf %33, %3 : vector<16x128xf32>
    %38 = arith.addf %37, %36 : vector<16x128xf32>
    %39 = tpu.iota {dimensions = array<i32: 0>} : vector<16x128xi32>
    %c1_i32_13 = arith.constant 1 : i32
    %40 = tpu.dynamic_rotate %38 by %c1_i32_13 dim 0 : vector<16x128xf32>, i32 -> vector<16x128xf32>
    %c15_i32_14 = arith.constant 15 : i32
    %41 = tpu.dynamic_rotate %38 by %c15_i32_14 dim 0 : vector<16x128xf32>, i32 -> vector<16x128xf32>
    %c0_i32_15 = arith.constant 0 : i32
    %42 = vector.broadcast %c0_i32_15 : i32 to vector<16x128xi32>
    %43 = arith.cmpi eq, %39, %42 : vector<16x128xi32>
    %44 = arith.select %43, %41, %40 : vector<16x128xi1>, vector<16x128xf32>
    %c15_i32_16 = arith.constant 15 : i32
    %45 = vector.broadcast %c15_i32_16 : i32 to vector<16x128xi32>
    %46 = arith.cmpi eq, %39, %45 : vector<16x128xi32>
    %47 = arith.select %46, %40, %41 : vector<16x128xi1>, vector<16x128xf32>
    %48 = arith.addf %44, %38 : vector<16x128xf32>
    %49 = arith.addf %48, %47 : vector<16x128xf32>
    %cst_17 = arith.constant 0.111111112 : f32
    %50 = vector.broadcast %cst_17 : f32 to vector<16x128xf32>
    %51 = arith.mulf %49, %50 : vector<16x128xf32>
    %52 = arith.mulf %27, %27 : vector<16x128xf32>
    %53 = arith.mulf %51, %51 : vector<16x128xf32>
    %54 = arith.mulf %27, %51 : vector<16x128xf32>
    %55 = arith.mulf %1, %1 : vector<16x128xf32>
    %56 = tpu.iota {dimensions = array<i32: 1>} : vector<16x128xi32>
    %c1_i32_18 = arith.constant 1 : i32
    %57 = tpu.dynamic_rotate %55 by %c1_i32_18 dim 1 : vector<16x128xf32>, i32 -> vector<16x128xf32>
    %c127_i32_19 = arith.constant 127 : i32
    %58 = tpu.dynamic_rotate %55 by %c127_i32_19 dim 1 : vector<16x128xf32>, i32 -> vector<16x128xf32>
    %c0_i32_20 = arith.constant 0 : i32
    %59 = vector.broadcast %c0_i32_20 : i32 to vector<16x128xi32>
    %60 = arith.cmpi eq, %56, %59 : vector<16x128xi32>
    %61 = arith.select %60, %58, %57 : vector<16x128xi1>, vector<16x128xf32>
    %c127_i32_21 = arith.constant 127 : i32
    %62 = vector.broadcast %c127_i32_21 : i32 to vector<16x128xi32>
    %63 = arith.cmpi eq, %56, %62 : vector<16x128xi32>
    %64 = arith.select %63, %57, %58 : vector<16x128xi1>, vector<16x128xf32>
    %65 = arith.addf %61, %55 : vector<16x128xf32>
    %66 = arith.addf %65, %64 : vector<16x128xf32>
    %67 = tpu.iota {dimensions = array<i32: 0>} : vector<16x128xi32>
    %c1_i32_22 = arith.constant 1 : i32
    %68 = tpu.dynamic_rotate %66 by %c1_i32_22 dim 0 : vector<16x128xf32>, i32 -> vector<16x128xf32>
    %c15_i32_23 = arith.constant 15 : i32
    %69 = tpu.dynamic_rotate %66 by %c15_i32_23 dim 0 : vector<16x128xf32>, i32 -> vector<16x128xf32>
    %c0_i32_24 = arith.constant 0 : i32
    %70 = vector.broadcast %c0_i32_24 : i32 to vector<16x128xi32>
    %71 = arith.cmpi eq, %67, %70 : vector<16x128xi32>
    %72 = arith.select %71, %69, %68 : vector<16x128xi1>, vector<16x128xf32>
    %c15_i32_25 = arith.constant 15 : i32
    %73 = vector.broadcast %c15_i32_25 : i32 to vector<16x128xi32>
    %74 = arith.cmpi eq, %67, %73 : vector<16x128xi32>
    %75 = arith.select %74, %68, %69 : vector<16x128xi1>, vector<16x128xf32>
    %76 = arith.addf %72, %66 : vector<16x128xf32>
    %77 = arith.addf %76, %75 : vector<16x128xf32>
    %cst_26 = arith.constant 0.111111112 : f32
    %78 = vector.broadcast %cst_26 : f32 to vector<16x128xf32>
    %79 = arith.mulf %77, %78 : vector<16x128xf32>
    %80 = arith.subf %79, %52 : vector<16x128xf32>
    %81 = arith.mulf %3, %3 : vector<16x128xf32>
    %82 = tpu.iota {dimensions = array<i32: 1>} : vector<16x128xi32>
    %c1_i32_27 = arith.constant 1 : i32
    %83 = tpu.dynamic_rotate %81 by %c1_i32_27 dim 1 : vector<16x128xf32>, i32 -> vector<16x128xf32>
    %c127_i32_28 = arith.constant 127 : i32
    %84 = tpu.dynamic_rotate %81 by %c127_i32_28 dim 1 : vector<16x128xf32>, i32 -> vector<16x128xf32>
    %c0_i32_29 = arith.constant 0 : i32
    %85 = vector.broadcast %c0_i32_29 : i32 to vector<16x128xi32>
    %86 = arith.cmpi eq, %82, %85 : vector<16x128xi32>
    %87 = arith.select %86, %84, %83 : vector<16x128xi1>, vector<16x128xf32>
    %c127_i32_30 = arith.constant 127 : i32
    %88 = vector.broadcast %c127_i32_30 : i32 to vector<16x128xi32>
    %89 = arith.cmpi eq, %82, %88 : vector<16x128xi32>
    %90 = arith.select %89, %83, %84 : vector<16x128xi1>, vector<16x128xf32>
    %91 = arith.addf %87, %81 : vector<16x128xf32>
    %92 = arith.addf %91, %90 : vector<16x128xf32>
    %93 = tpu.iota {dimensions = array<i32: 0>} : vector<16x128xi32>
    %c1_i32_31 = arith.constant 1 : i32
    %94 = tpu.dynamic_rotate %92 by %c1_i32_31 dim 0 : vector<16x128xf32>, i32 -> vector<16x128xf32>
    %c15_i32_32 = arith.constant 15 : i32
    %95 = tpu.dynamic_rotate %92 by %c15_i32_32 dim 0 : vector<16x128xf32>, i32 -> vector<16x128xf32>
    %c0_i32_33 = arith.constant 0 : i32
    %96 = vector.broadcast %c0_i32_33 : i32 to vector<16x128xi32>
    %97 = arith.cmpi eq, %93, %96 : vector<16x128xi32>
    %98 = arith.select %97, %95, %94 : vector<16x128xi1>, vector<16x128xf32>
    %c15_i32_34 = arith.constant 15 : i32
    %99 = vector.broadcast %c15_i32_34 : i32 to vector<16x128xi32>
    %100 = arith.cmpi eq, %93, %99 : vector<16x128xi32>
    %101 = arith.select %100, %94, %95 : vector<16x128xi1>, vector<16x128xf32>
    %102 = arith.addf %98, %92 : vector<16x128xf32>
    %103 = arith.addf %102, %101 : vector<16x128xf32>
    %cst_35 = arith.constant 0.111111112 : f32
    %104 = vector.broadcast %cst_35 : f32 to vector<16x128xf32>
    %105 = arith.mulf %103, %104 : vector<16x128xf32>
    %106 = arith.subf %105, %53 : vector<16x128xf32>
    %107 = arith.mulf %1, %3 : vector<16x128xf32>
    %108 = tpu.iota {dimensions = array<i32: 1>} : vector<16x128xi32>
    %c1_i32_36 = arith.constant 1 : i32
    %109 = tpu.dynamic_rotate %107 by %c1_i32_36 dim 1 : vector<16x128xf32>, i32 -> vector<16x128xf32>
    %c127_i32_37 = arith.constant 127 : i32
    %110 = tpu.dynamic_rotate %107 by %c127_i32_37 dim 1 : vector<16x128xf32>, i32 -> vector<16x128xf32>
    %c0_i32_38 = arith.constant 0 : i32
    %111 = vector.broadcast %c0_i32_38 : i32 to vector<16x128xi32>
    %112 = arith.cmpi eq, %108, %111 : vector<16x128xi32>
    %113 = arith.select %112, %110, %109 : vector<16x128xi1>, vector<16x128xf32>
    %c127_i32_39 = arith.constant 127 : i32
    %114 = vector.broadcast %c127_i32_39 : i32 to vector<16x128xi32>
    %115 = arith.cmpi eq, %108, %114 : vector<16x128xi32>
    %116 = arith.select %115, %109, %110 : vector<16x128xi1>, vector<16x128xf32>
    %117 = arith.addf %113, %107 : vector<16x128xf32>
    %118 = arith.addf %117, %116 : vector<16x128xf32>
    %119 = tpu.iota {dimensions = array<i32: 0>} : vector<16x128xi32>
    %c1_i32_40 = arith.constant 1 : i32
    %120 = tpu.dynamic_rotate %118 by %c1_i32_40 dim 0 : vector<16x128xf32>, i32 -> vector<16x128xf32>
    %c15_i32_41 = arith.constant 15 : i32
    %121 = tpu.dynamic_rotate %118 by %c15_i32_41 dim 0 : vector<16x128xf32>, i32 -> vector<16x128xf32>
    %c0_i32_42 = arith.constant 0 : i32
    %122 = vector.broadcast %c0_i32_42 : i32 to vector<16x128xi32>
    %123 = arith.cmpi eq, %119, %122 : vector<16x128xi32>
    %124 = arith.select %123, %121, %120 : vector<16x128xi1>, vector<16x128xf32>
    %c15_i32_43 = arith.constant 15 : i32
    %125 = vector.broadcast %c15_i32_43 : i32 to vector<16x128xi32>
    %126 = arith.cmpi eq, %119, %125 : vector<16x128xi32>
    %127 = arith.select %126, %120, %121 : vector<16x128xi1>, vector<16x128xf32>
    %128 = arith.addf %124, %118 : vector<16x128xf32>
    %129 = arith.addf %128, %127 : vector<16x128xf32>
    %cst_44 = arith.constant 0.111111112 : f32
    %130 = vector.broadcast %cst_44 : f32 to vector<16x128xf32>
    %131 = arith.mulf %129, %130 : vector<16x128xf32>
    %132 = arith.subf %131, %54 : vector<16x128xf32>
    %cst_45 = arith.constant 2.000000e+00 : f32
    %133 = vector.broadcast %cst_45 : f32 to vector<16x128xf32>
    %134 = arith.mulf %133, %54 : vector<16x128xf32>
    %cst_46 = arith.constant 9.99999974E-5 : f32
    %135 = vector.broadcast %cst_46 : f32 to vector<16x128xf32>
    %136 = arith.addf %134, %135 : vector<16x128xf32>
    %cst_47 = arith.constant 2.000000e+00 : f32
    %137 = vector.broadcast %cst_47 : f32 to vector<16x128xf32>
    %138 = arith.mulf %137, %132 : vector<16x128xf32>
    %cst_48 = arith.constant 8.99999984E-4 : f32
    %139 = vector.broadcast %cst_48 : f32 to vector<16x128xf32>
    %140 = arith.addf %138, %139 : vector<16x128xf32>
    %141 = arith.mulf %136, %140 : vector<16x128xf32>
    %142 = arith.addf %52, %53 : vector<16x128xf32>
    %cst_49 = arith.constant 9.99999974E-5 : f32
    %143 = vector.broadcast %cst_49 : f32 to vector<16x128xf32>
    %144 = arith.addf %142, %143 : vector<16x128xf32>
    %145 = arith.addf %80, %106 : vector<16x128xf32>
    %cst_50 = arith.constant 8.99999984E-4 : f32
    %146 = vector.broadcast %cst_50 : f32 to vector<16x128xf32>
    %147 = arith.addf %145, %146 : vector<16x128xf32>
    %148 = arith.mulf %144, %147 : vector<16x128xf32>
    %149 = arith.divf %141, %148 : vector<16x128xf32>
    %cst_51 = arith.constant 1.000000e+00 : f32
    %150 = vector.broadcast %cst_51 : f32 to vector<16x128xf32>
    %151 = arith.subf %150, %149 : vector<16x128xf32>
    %cst_52 = arith.constant 5.000000e-01 : f32
    %152 = vector.broadcast %cst_52 : f32 to vector<16x128xf32>
    %153 = arith.mulf %151, %152 : vector<16x128xf32>
    %cst_53 = arith.constant 0.000000e+00 : f32
    %cst_54 = arith.constant 1.000000e+00 : f32
    %154 = vector.broadcast %cst_53 : f32 to vector<16x128xf32>
    %155 = arith.maximumf %154, %153 : vector<16x128xf32>
    %156 = vector.broadcast %cst_54 : f32 to vector<16x128xf32>
    %157 = arith.minimumf %156, %155 : vector<16x128xf32>
    %c0_55 = arith.constant 0 : index
    %c0_56 = arith.constant 0 : index
    %c0_57 = arith.constant 0 : index
    %158 = vector.load %arg3[%c0_55, %c0_56, %c0_57] : memref<1x16x128xf32, #tpu.memory_space<vmem>>, vector<1x16x128xf32>
    %159 = vector.shape_cast %158 : vector<1x16x128xf32> to vector<16x128xf32>
    %160 = vector.shape_cast %157 : vector<16x128xf32> to vector<1x16x128xf32>
    tpu.vector_store %arg3[%c0_55, %c0_56, %c0_57], %160 {strides = array<i32>} : memref<1x16x128xf32, #tpu.memory_space<vmem>>, vector<1x16x128xf32>,
    return
  }
  func.func @transform_0(%arg0: i32) -> (i32, i32, i32) {
    %c0_i32 = arith.constant 0 : i32
    %c0_i32_0 = arith.constant 0 : i32
    %c0_i32_1 = arith.constant 0 : i32
    return %arg0, %c0_i32, %c0_i32_0 : i32, i32, i32
  }
  func.func @transform_1(%arg0: i32) -> (i32, i32, i32) {
    %c0_i32 = arith.constant 0 : i32
    %c0_i32_0 = arith.constant 0 : i32
    %c0_i32_1 = arith.constant 0 : i32
    return %arg0, %c0_i32, %c0_i32_0 : i32, i32, i32
  }
  func.func @transform_2(%arg0: i32) -> (i32, i32, i32) {
    %c0_i32 = arith.constant 0 : i32
    %c0_i32_0 = arith.constant 0 : i32
    %c0_i32_1 = arith.constant 0 : i32
    return %arg0, %c0_i32, %c0_i32_0 : i32, i32, i32
  }
}

</mosaic_0001>

<llo_original>
// kernel: tpu_custom_call.1
$region0: #{tpu_custom_call.1}
  #allocation0 [shape = 'u32[]', space=smem, size = 0x4, offset = 0x4, fixed_abs, tag = 'smem constant byte address 0x4 - core index']
  #allocation1 [shape = 'u32[144,128]{1,0:T(1,128)}', space=vmem, size = 0x12000, scoped, tag = 'internal scratch']
  %s0 = inlined_call_operand.hbm [shape: f32[6,16,128], index: 0, kind: input, shape index: {}]
  %s1 = inlined_call_operand.hbm [shape: f32[6,16,128], index: 1, kind: input, shape index: {}]
  %s2 = inlined_call_operand.hbm [shape: f32[6,16,128], index: 2, kind: output, shape index: {}]
  %s3 = sld [smem:[#allocation0]]
  $region49: #{tpu_custom_call.1} parent=0
    _
  %s5 = ssub.s32 1, %s3
  %s6 = scalar_select 0, %s5, %s3
  $region1: #{tpu_custom_call.1} parent=0
    #allocation2 [shape = 'u8[16384]{0}', space=vmem, size = 0x4000, scoped, tag = 'input window, operand 0']
    #allocation3 [shape = 's32[2]{0}', space=sflag, size = 0x8, scoped, tag = 'scoped memory for tpu_custom_call.1']
    #allocation4 [shape = 's32[2]{0}', space=sflag, size = 0x8, scoped, tag = 'scoped memory for tpu_custom_call.1']
    #allocation5 [shape = 'u8[16384]{0}', space=vmem, size = 0x4000, scoped, tag = 'input window, operand 1']
    #allocation6 [shape = 's32[2]{0}', space=sflag, size = 0x8, scoped, tag = 'scoped memory for tpu_custom_call.1']
    #allocation7 [shape = 'u8[16384]{0}', space=vmem, size = 0x4000, scoped, tag = 'output window, operand 0']
    %7 = vsyncpa [#allocation3], 0
    %s8 = scalar_lea.sflag [#allocation3], 1
    %9 = vsyncpa %s8, 0
    %10 = vsyncpa [#allocation6], 0
    %s11 = scalar_lea.sflag [#allocation6], 1
    %12 = vsyncpa %s11, 0
    %13 = vsyncpa [#allocation4], 0
    %s14 = scalar_lea.sflag [#allocation4], 1
    %15 = vsyncpa %s14, 0
    loop: start=0, step=1, limit=8
    $region2: #{tpu_custom_call.1} parent=1 // loop_pre_header
      _
    $region3: #{tpu_custom_call.1} parent=1 // loop_header
      %s17 = sphi 0, %s21
      %p18 = scmp.ge.s32.totalorder %s17, 8
      %s27 = sphi 0, %s29
      %s30 = sphi 0, %s27
      %s31 = sphi 0, %s30
      %s47 = sphi 0, %s31
      %s53 = sphi 0, %s55
      %s56 = sphi 0, %s53
      %s57 = sphi 0, %s56
      %s73 = sphi 0, %s57
      %s79 = sphi 0, %s81
      %s82 = sphi 0, %s79
      %s83 = sphi 0, %s82
      %s99 = sphi 0, %s83
    $region4: #{tpu_custom_call.1} parent=1 // loop_header_branch
      %20 = sbr.rel (%p18) target = $region8
    $region5: #{tpu_custom_call.1} parent=1 // loop_body
      %s22 = ssub.s32 %s17, 1
      %s23 = ssub.s32 %s17, 2
      %s24 = sadd.s32 %s17, 1
      %s25 = ssub.s32 %s17, %s24
      %p26 = scmp.eq.s32.totalorder %s25, 0
      %s28 = sadd.s32 %s27, 1
      %s29 = scalar_select %p26, %s27, %s28
      %p32 = pneg %p26
      %p33 = scmp.eq.s32.totalorder %s17, 5
      %p34 = por %p32, %p33
      %p35 = scmp.ne.s32.totalorder %s27, %s30
      %p36 = scmp.eq.s32.totalorder %s17, 0
      %p37 = por %p35, %p36
      %p38 = scmp.ne.s32.totalorder %s27, %s30
      %p39 = scmp.eq.s32.totalorder %s22, 5
      %p40 = por %p38, %p39
      %p41 = scmp.ne.s32.totalorder %s30, %s31
      %p42 = scmp.eq.s32.totalorder %s22, 0
      %p43 = por %p41, %p42
      %p44 = scmp.ne.s32.totalorder %s30, %s31
      %p45 = scmp.eq.s32.totalorder %s23, 5
      %p46 = por %p44, %p45
      %p48 = scmp.ne.s32.totalorder %s31, %s47
      %p49 = scmp.eq.s32.totalorder %s23, 0
      %p50 = por %p48, %p49
      %s51 = ssub.s32 %s17, %s24
      %p52 = scmp.eq.s32.totalorder %s51, 0
      %s54 = sadd.s32 %s53, 1
      %s55 = scalar_select %p52, %s53, %s54
      %p58 = pneg %p52
      %p59 = scmp.eq.s32.totalorder %s17, 5
      %p60 = por %p58, %p59
      %p61 = scmp.ne.s32.totalorder %s53, %s56
      %p62 = scmp.eq.s32.totalorder %s17, 0
      %p63 = por %p61, %p62
      %p64 = scmp.ne.s32.totalorder %s53, %s56
      %p65 = scmp.eq.s32.totalorder %s22, 5
      %p66 = por %p64, %p65
      %p67 = scmp.ne.s32.totalorder %s56, %s57
      %p68 = scmp.eq.s32.totalorder %s22, 0
      %p69 = por %p67, %p68
      %p70 = scmp.ne.s32.totalorder %s56, %s57
      %p71 = scmp.eq.s32.totalorder %s23, 5
      %p72 = por %p70, %p71
      %p74 = scmp.ne.s32.totalorder %s57, %s73
      %p75 = scmp.eq.s32.totalorder %s23, 0
      %p76 = por %p74, %p75
      %s77 = ssub.s32 %s17, %s24
      %p78 = scmp.eq.s32.totalorder %s77, 0
      %s80 = sadd.s32 %s79, 1
      %s81 = scalar_select %p78, %s79, %s80
      %p84 = pneg %p78
      %p85 = scmp.eq.s32.totalorder %s17, 5
      %p86 = por %p84, %p85
      %p87 = scmp.ne.s32.totalorder %s79, %s82
      %p88 = scmp.eq.s32.totalorder %s17, 0
      %p89 = por %p87, %p88
      %p90 = scmp.ne.s32.totalorder %s79, %s82
      %p91 = scmp.eq.s32.totalorder %s22, 5
      %p92 = por %p90, %p91
      %p93 = scmp.ne.s32.totalorder %s82, %s83
      %p94 = scmp.eq.s32.totalorder %s22, 0
      %p95 = por %p93, %p94
      %p96 = scmp.ne.s32.totalorder %s82, %s83
      %p97 = scmp.eq.s32.totalorder %s23, 5
      %p98 = por %p96, %p97
      %p100 = scmp.ne.s32.totalorder %s83, %s99
      %p101 = scmp.eq.s32.totalorder %s23, 0
      %p102 = por %p100, %p101
      %p103 = scmp.le.s32.totalorder 1, %s17
      %p104 = scmp.lt.s32.totalorder %s17, 7
      %p105 = pnand %p103, %p104
      %p106 = pneg %p105
      // Predicated region
      $region9: #{tpu_custom_call.1} parent=5 // pred_check
        _
      $region10: #{tpu_custom_call.1} parent=5 // pred_check_branch
        %108 = sbr.rel (%p105) target = $region12
      $region11: #{tpu_custom_call.1} parent=5 // pred_region
        %s109 = ssub.s32 %s17, 1
      $region12: #{tpu_custom_call.1} parent=5 // pred_fallthru
        _
      %p110 = scmp.lt.s32.totalorder %s17, 6
      // Predicated region
      $region13: #{tpu_custom_call.1} parent=5 // pred_check
        %p111 = pneg %p110
      $region14: #{tpu_custom_call.1} parent=5 // pred_check_branch
        %113 = sbr.rel (%p111) target = $region16
      $region15: #{tpu_custom_call.1} parent=5 // pred_region
        // Predicated region
        $region17: #{tpu_custom_call.1} parent=15 // pred_check
          %p114 = pneg %p37
        $region18: #{tpu_custom_call.1} parent=15 // pred_check_branch
          %116 = sbr.rel (%p114) target = $region20
        $region19: #{tpu_custom_call.1} parent=15 // pred_region
          %s117 = sand.u32 %s27, 1
          %s118 = scalar_lea.sflag [#allocation3], %s117
          %s119 = sand.u32 %s27, 1
          %s120 = smul.addr %s119, 16
          %s121 = scalar_lea.vmem [#allocation2], %s120
          %s123 = ssub.s32 256, 256
          %124 = vsyncadd %s118, %s123
          %s125 = smul.addr %s17, 2
          %s126 = smul.addr %s125, 128
          %s127 = scalar_lea.hbm %s0, %s126
          %s128 = sshll.u32 %s121, 4
          %s129 = int_to_ptr.vmem [resolvable:$true] %s128
          %134 = dma.hbm_to_vmem [thread:$0]  %s127, 256, %s129, %s118, 128, 128, 8
        $region20: #{tpu_custom_call.1} parent=15 // pred_fallthru
          _
        // Predicated region
        $region21: #{tpu_custom_call.1} parent=15 // pred_check
          %p135 = pneg %p63
        $region22: #{tpu_custom_call.1} parent=15 // pred_check_branch
          %137 = sbr.rel (%p135) target = $region24
        $region23: #{tpu_custom_call.1} parent=15 // pred_region
          %s138 = sand.u32 %s53, 1
          %s139 = scalar_lea.sflag [#allocation6], %s138
          %s140 = sand.u32 %s53, 1
          %s141 = smul.addr %s140, 16
          %s142 = scalar_lea.vmem [#allocation5], %s141
          %s144 = ssub.s32 256, 256
          %145 = vsyncadd %s139, %s144
          %s146 = smul.addr %s17, 2
          %s147 = smul.addr %s146, 128
          %s148 = scalar_lea.hbm %s1, %s147
          %s149 = sshll.u32 %s142, 4
          %s150 = int_to_ptr.vmem [resolvable:$true] %s149
          %155 = dma.hbm_to_vmem [thread:$0]  %s148, 256, %s150, %s139, 128, 128, 8
        $region24: #{tpu_custom_call.1} parent=15 // pred_fallthru
          _
      $region16: #{tpu_custom_call.1} parent=5 // pred_fallthru
        _
      %p156 = scmp.le.s32.totalorder 1, %s17
      %p157 = scmp.lt.s32.totalorder %s17, 7
      %p158 = pnand %p156, %p157
      %p159 = pneg %p158
      // Predicated region
      $region25: #{tpu_custom_call.1} parent=5 // pred_check
        _
      $region26: #{tpu_custom_call.1} parent=5 // pred_check_branch
        %161 = sbr.rel (%p158) target = $region28
      $region27: #{tpu_custom_call.1} parent=5 // pred_region
        %s162 = ssub.s32 %s17, 1
        %s163 = sand.u32 %s30, 1
        %s164 = scalar_lea.sflag [#allocation3], %s163
        %s165 = sand.u32 %s30, 1
        %s166 = smul.addr %s165, 16
        %s167 = scalar_lea.vmem [#allocation2], %s166
        // Predicated region
        $region29: #{tpu_custom_call.1} parent=27 // pred_check
          %p168 = pneg %p43
        $region30: #{tpu_custom_call.1} parent=27 // pred_check_branch
          %170 = sbr.rel (%p168) target = $region32
        $region31: #{tpu_custom_call.1} parent=27 // pred_region
          %171 = dma.done %s164, 256
        $region32: #{tpu_custom_call.1} parent=27 // pred_fallthru
          _
        %s172 = sand.u32 %s56, 1
        %s173 = scalar_lea.sflag [#allocation6], %s172
        %s174 = sand.u32 %s56, 1
        %s175 = smul.addr %s174, 16
        %s176 = scalar_lea.vmem [#allocation5], %s175
        // Predicated region
        $region33: #{tpu_custom_call.1} parent=27 // pred_check
          %p177 = pneg %p69
        $region34: #{tpu_custom_call.1} parent=27 // pred_check_branch
          %179 = sbr.rel (%p177) target = $region36
        $region35: #{tpu_custom_call.1} parent=27 // pred_region
          %180 = dma.done %s173, 256
        $region36: #{tpu_custom_call.1} parent=27 // pred_fallthru
          _
        %s181 = sand.u32 %s30, 1
        %s182 = scalar_lea.sflag [#allocation3], %s181
        %s183 = sand.u32 %s30, 1
        %s184 = smul.addr %s183, 16
        %s185 = scalar_lea.vmem [#allocation2], %s184
        %p186 = pneg %p43
        %p187 = pneg %p40
        %s188 = sand.u32 %s56, 1
        %s189 = scalar_lea.sflag [#allocation6], %s188
        %s190 = sand.u32 %s56, 1
        %s191 = smul.addr %s190, 16
        %s192 = scalar_lea.vmem [#allocation5], %s191
        %p193 = pneg %p69
        %p194 = pneg %p66
        %p195 = pneg %p95
        %p196 = pneg %p92
        %s197 = sand.u32 %s82, 1
        %s198 = scalar_lea.sflag [#allocation4], %s197
        %s199 = sand.u32 %s82, 1
        %s200 = smul.addr %s199, 16
        %s201 = scalar_lea.vmem [#allocation7], %s200
        %v202 = vld [vmem:[%s167] sm:$0xff]
        %v203 = vld [vmem:[%s167 + $0x8] sm:$0xff]
        %v204 = vld [vmem:[%s176] sm:$0xff]
        %v205 = vld [vmem:[%s176 + $0x8] sm:$0xff]
        %v206 = vlaneseq
        %v207 = vand.u32 %v206, 127
        %208 = vrot.lane.b32.xlu0 %v202, 1
        %v209 = vpop.permute.xlu0 %208
        %210 = vrot.lane.b32.xlu0 %v203, 1
        %v211 = vpop.permute.xlu0 %210
        %212 = vrot.lane.b32.xlu0 %v202, 127
        %v213 = vpop.permute.xlu0 %212
        %214 = vrot.lane.b32.xlu0 %v203, 127
        %v215 = vpop.permute.xlu0 %214
        %vm216 = vcmp.eq.s32.totalorder %v207, 0
        %v217 = vsel %vm216, %v213, %v209
        %v218 = vsel %vm216, %v215, %v211
        %vm219 = vcmp.eq.s32.totalorder %v207, 127
        %v220 = vsel %vm219, %v209, %v213
        %v221 = vsel %vm219, %v211, %v215
        %v222 = vadd.f32 %v217, %v202
        %v223 = vadd.f32 %v218, %v203
        %v224 = vadd.f32 %v222, %v220
        %v225 = vadd.f32 %v223, %v221
        %v226 = vlaneseq
        %v227 = vshrl.u32 %v226, 7
        %v228 = vadd.s32 %v227, 8
        %v229 = vrot.slane %v224, 7
        %v230 = vrot.slane %v225, 7
        %vm231 = vcmp.lt.s32.totalorder %v227, 1
        %v232 = vsel %vm231, %v229, %v230
        %v233 = vsel %vm231, %v230, %v229
        %v234 = vrot.slane %v224, 1
        %v235 = vrot.slane %v225, 1
        %vm236 = vcmp.lt.s32.totalorder %v227, 7
        %v237 = vsel %vm236, %v234, %v235
        %v238 = vsel %vm236, %v235, %v234
        %vm239 = vcmp.eq.s32.totalorder %v227, 0
        %vm240 = vcmp.eq.s32.totalorder %v228, 0
        %v241 = vsel %vm239, %v237, %v233
        %v242 = vsel %vm240, %v238, %v232
        %vm243 = vcmp.eq.s32.totalorder %v227, 15
        %vm244 = vcmp.eq.s32.totalorder %v228, 15
        %v245 = vsel %vm243, %v233, %v237
        %v246 = vsel %vm244, %v232, %v238
        %v247 = vadd.f32 %v241, %v224
        %v248 = vadd.f32 %v242, %v225
        %v249 = vadd.f32 %v247, %v245
        %v250 = vadd.f32 %v248, %v246
        %v251 = vmul.f32 %v249, 0.11111111
        %v252 = vmul.f32 %v250, 0.11111111
        %253 = vrot.lane.b32.xlu0 %v204, 1
        %v254 = vpop.permute.xlu0 %253
        %255 = vrot.lane.b32.xlu0 %v205, 1
        %v256 = vpop.permute.xlu0 %255
        %257 = vrot.lane.b32.xlu0 %v204, 127
        %v258 = vpop.permute.xlu0 %257
        %259 = vrot.lane.b32.xlu0 %v205, 127
        %v260 = vpop.permute.xlu0 %259
        %v261 = vsel %vm216, %v258, %v254
        %v262 = vsel %vm216, %v260, %v256
        %v263 = vsel %vm219, %v254, %v258
        %v264 = vsel %vm219, %v256, %v260
        %v265 = vadd.f32 %v261, %v204
        %v266 = vadd.f32 %v262, %v205
        %v267 = vadd.f32 %v265, %v263
        %v268 = vadd.f32 %v266, %v264
        %v269 = vrot.slane %v267, 7
        %v270 = vrot.slane %v268, 7
        %v271 = vsel %vm231, %v269, %v270
        %v272 = vsel %vm231, %v270, %v269
        %v273 = vrot.slane %v267, 1
        %v274 = vrot.slane %v268, 1
        %v275 = vsel %vm236, %v273, %v274
        %v276 = vsel %vm236, %v274, %v273
        %v277 = vsel %vm239, %v275, %v272
        %v278 = vsel %vm240, %v276, %v271
        %v279 = vsel %vm243, %v272, %v275
        %v280 = vsel %vm244, %v271, %v276
        %v281 = vadd.f32 %v277, %v267
        %v282 = vadd.f32 %v278, %v268
        %v283 = vadd.f32 %v281, %v279
        %v284 = vadd.f32 %v282, %v280
        %v285 = vmul.f32 %v283, 0.11111111
        %v286 = vmul.f32 %v284, 0.11111111
        %v287 = vmul.f32 %v251, %v251
        %v288 = vmul.f32 %v252, %v252
        %v289 = vmul.f32 %v285, %v285
        %v290 = vmul.f32 %v286, %v286
        %v291 = vmul.f32 %v251, %v285
        %v292 = vmul.f32 %v252, %v286
        %v293 = vmul.f32 %v202, %v202
        %v294 = vmul.f32 %v203, %v203
        %295 = vrot.lane.b32.xlu0 %v293, 1
        %v296 = vpop.permute.xlu0 %295
        %297 = vrot.lane.b32.xlu0 %v294, 1
        %v298 = vpop.permute.xlu0 %297
        %299 = vrot.lane.b32.xlu0 %v293, 127
        %v300 = vpop.permute.xlu0 %299
        %301 = vrot.lane.b32.xlu0 %v294, 127
        %v302 = vpop.permute.xlu0 %301
        %v303 = vsel %vm216, %v300, %v296
        %v304 = vsel %vm216, %v302, %v298
        %v305 = vsel %vm219, %v296, %v300
        %v306 = vsel %vm219, %v298, %v302
        %v307 = vadd.f32 %v303, %v293
        %v308 = vadd.f32 %v304, %v294
        %v309 = vadd.f32 %v307, %v305
        %v310 = vadd.f32 %v308, %v306
        %v311 = vrot.slane %v309, 7
        %v312 = vrot.slane %v310, 7
        %v313 = vsel %vm231, %v311, %v312
        %v314 = vsel %vm231, %v312, %v311
        %v315 = vrot.slane %v309, 1
        %v316 = vrot.slane %v310, 1
        %v317 = vsel %vm236, %v315, %v316
        %v318 = vsel %vm236, %v316, %v315
        %v319 = vsel %vm239, %v317, %v314
        %v320 = vsel %vm240, %v318, %v313
        %v321 = vsel %vm243, %v314, %v317
        %v322 = vsel %vm244, %v313, %v318
        %v323 = vadd.f32 %v319, %v309
        %v324 = vadd.f32 %v320, %v310
        %v325 = vadd.f32 %v323, %v321
        %v326 = vadd.f32 %v324, %v322
        %v327 = vmul.f32 %v325, 0.11111111
        %v328 = vmul.f32 %v326, 0.11111111
        %v329 = vsub.f32 %v327, %v287
        %v330 = vsub.f32 %v328, %v288
        %v331 = vmul.f32 %v204, %v204
        %v332 = vmul.f32 %v205, %v205
        %333 = vrot.lane.b32.xlu0 %v331, 1
        %v334 = vpop.permute.xlu0 %333
        %335 = vrot.lane.b32.xlu0 %v332, 1
        %v336 = vpop.permute.xlu0 %335
        %337 = vrot.lane.b32.xlu0 %v331, 127
        %v338 = vpop.permute.xlu0 %337
        %339 = vrot.lane.b32.xlu0 %v332, 127
        %v340 = vpop.permute.xlu0 %339
        %v341 = vsel %vm216, %v338, %v334
        %v342 = vsel %vm216, %v340, %v336
        %v343 = vsel %vm219, %v334, %v338
        %v344 = vsel %vm219, %v336, %v340
        %v345 = vadd.f32 %v341, %v331
        %v346 = vadd.f32 %v342, %v332
        %v347 = vadd.f32 %v345, %v343
        %v348 = vadd.f32 %v346, %v344
        %v349 = vrot.slane %v347, 7
        %v350 = vrot.slane %v348, 7
        %v351 = vsel %vm231, %v349, %v350
        %v352 = vsel %vm231, %v350, %v349
        %v353 = vrot.slane %v347, 1
        %v354 = vrot.slane %v348, 1
        %v355 = vsel %vm236, %v353, %v354
        %v356 = vsel %vm236, %v354, %v353
        %v357 = vsel %vm239, %v355, %v352
        %v358 = vsel %vm240, %v356, %v351
        %v359 = vsel %vm243, %v352, %v355
        %v360 = vsel %vm244, %v351, %v356
        %v361 = vadd.f32 %v357, %v347
        %v362 = vadd.f32 %v358, %v348
        %v363 = vadd.f32 %v361, %v359
        %v364 = vadd.f32 %v362, %v360
        %v365 = vmul.f32 %v363, 0.11111111
        %v366 = vmul.f32 %v364, 0.11111111
        %v367 = vsub.f32 %v365, %v289
        %v368 = vsub.f32 %v366, %v290
        %v369 = vmul.f32 %v202, %v204
        %v370 = vmul.f32 %v203, %v205
        %371 = vrot.lane.b32.xlu0 %v369, 1
        %v372 = vpop.permute.xlu0 %371
        %373 = vrot.lane.b32.xlu0 %v370, 1
        %v374 = vpop.permute.xlu0 %373
        %375 = vrot.lane.b32.xlu0 %v369, 127
        %v376 = vpop.permute.xlu0 %375
        %377 = vrot.lane.b32.xlu0 %v370, 127
        %v378 = vpop.permute.xlu0 %377
        %v379 = vsel %vm216, %v376, %v372
        %v380 = vsel %vm216, %v378, %v374
        %v381 = vsel %vm219, %v372, %v376
        %v382 = vsel %vm219, %v374, %v378
        %v383 = vadd.f32 %v379, %v369
        %v384 = vadd.f32 %v380, %v370
        %v385 = vadd.f32 %v383, %v381
        %v386 = vadd.f32 %v384, %v382
        %v387 = vrot.slane %v385, 7
        %v388 = vrot.slane %v386, 7
        %v389 = vsel %vm231, %v387, %v388
        %v390 = vsel %vm231, %v388, %v387
        %v391 = vrot.slane %v385, 1
        %v392 = vrot.slane %v386, 1
        %v393 = vsel %vm236, %v391, %v392
        %v394 = vsel %vm236, %v392, %v391
        %v395 = vsel %vm239, %v393, %v390
        %v396 = vsel %vm240, %v394, %v389
        %v397 = vsel %vm243, %v390, %v393
        %v398 = vsel %vm244, %v389, %v394
        %v399 = vadd.f32 %v395, %v385
        %v400 = vadd.f32 %v396, %v386
        %v401 = vadd.f32 %v399, %v397
        %v402 = vadd.f32 %v400, %v398
        %v403 = vmul.f32 %v401, 0.11111111
        %v404 = vmul.f32 %v402, 0.11111111
        %v405 = vsub.f32 %v403, %v291
        %v406 = vsub.f32 %v404, %v292
        %v407 = vmul.f32 %v291, 2.0
        %v408 = vmul.f32 %v292, 2.0
        %v409 = vadd.f32 %v407, 0.0001
        %v410 = vadd.f32 %v408, 0.0001
        %v411 = vmul.f32 %v405, 2.0
        %v412 = vmul.f32 %v406, 2.0
        %v413 = vadd.f32 %v411, 0.0009
        %v414 = vadd.f32 %v412, 0.0009
        %v415 = vmul.f32 %v409, %v413
        %v416 = vmul.f32 %v410, %v414
        %v417 = vadd.f32 %v287, %v289
        %v418 = vadd.f32 %v288, %v290
        %v419 = vadd.f32 %v417, 0.0001
        %v420 = vadd.f32 %v418, 0.0001
        %v421 = vadd.f32 %v329, %v367
        %v422 = vadd.f32 %v330, %v368
        %v423 = vadd.f32 %v421, 0.0009
        %v424 = vadd.f32 %v422, 0.0009
        %v425 = vmul.f32 %v419, %v423
        %v426 = vmul.f32 %v420, %v424
        %v427 = vrcp.pop %v425
        %v428 = vmul.f32 %v415, %v427
        %v429 = vrcp.pop %v426
        %v430 = vmul.f32 %v416, %v429
        %v431 = vsub.f32 1.0, %v428
        %v432 = vsub.f32 1.0, %v430
        %v433 = vmul.f32 %v431, 0.5
        %v434 = vmul.f32 %v432, 0.5
        %v435 = vmax.f32 %v433, 0.0
        %v436 = vmax.f32 %v434, 0.0
        %v437 = vmin.f32 %v435, 1.0
        %v438 = vmin.f32 %v436, 1.0
        %439 = vst [vmem:[%s201] sm:$0xff] %v437
        %440 = vst [vmem:[%s201 + $0x8] sm:$0xff] %v438
        %s441 = sand.u32 %s82, 1
        %s442 = scalar_lea.sflag [#allocation4], %s441
        %s443 = sand.u32 %s82, 1
        %s444 = smul.addr %s443, 16
        %s445 = scalar_lea.vmem [#allocation7], %s444
        // Predicated region
        $region37: #{tpu_custom_call.1} parent=27 // pred_check
          %p446 = pneg %p92
        $region38: #{tpu_custom_call.1} parent=27 // pred_check_branch
          %448 = sbr.rel (%p446) target = $region40
        $region39: #{tpu_custom_call.1} parent=27 // pred_region
          %s450 = ssub.s32 256, 256
          %451 = vsyncadd %s442, %s450
          %s452 = smul.addr %s22, 2
          %s453 = smul.addr %s452, 128
          %s454 = scalar_lea.hbm %s2, %s453
          %s455 = sshll.u32 %s445, 4
          %s456 = int_to_ptr.vmem [resolvable:$true] %s455
          %461 = dma.vmem_to_hbm [thread:$0]  %s456, 256, %s454, %s442, 128, 128, 8
        $region40: #{tpu_custom_call.1} parent=27 // pred_fallthru
          _
      $region28: #{tpu_custom_call.1} parent=5 // pred_fallthru
        _
      %p462 = scmp.le.s32.totalorder 2, %s17
      // Predicated region
      $region41: #{tpu_custom_call.1} parent=5 // pred_check
        %p463 = pneg %p462
      $region42: #{tpu_custom_call.1} parent=5 // pred_check_branch
        %465 = sbr.rel (%p463) target = $region44
      $region43: #{tpu_custom_call.1} parent=5 // pred_region
        %s466 = ssub.s32 %s17, 2
        // Predicated region
        $region45: #{tpu_custom_call.1} parent=43 // pred_check
          %p467 = pneg %p98
        $region46: #{tpu_custom_call.1} parent=43 // pred_check_branch
          %469 = sbr.rel (%p467) target = $region48
        $region47: #{tpu_custom_call.1} parent=43 // pred_region
          %s470 = sand.u32 %s83, 1
          %s471 = scalar_lea.sflag [#allocation4], %s470
          %s472 = sand.u32 %s83, 1
          %s473 = smul.addr %s472, 16
          %s474 = scalar_lea.vmem [#allocation7], %s473
          %475 = dma.done %s471, 256
        $region48: #{tpu_custom_call.1} parent=43 // pred_fallthru
          _
      $region44: #{tpu_custom_call.1} parent=5 // pred_fallthru
        _
    $region6: #{tpu_custom_call.1} parent=1 // loop_footer
      %s21 = sadd.s32 1, %s17
    $region7: #{tpu_custom_call.1} parent=1 // loop_footer_branch
      %16 = sbr.rel target = $region3
    $region8: #{tpu_custom_call.1} parent=1 // loop_exit
      _
    %476 = vsyncpa [#allocation3], 1
    %s477 = scalar_lea.sflag [#allocation3], 1
    %478 = vsyncpa %s477, 1
    %479 = vsyncpa [#allocation6], 1
    %s480 = scalar_lea.sflag [#allocation6], 1
    %481 = vsyncpa %s480, 1
    %482 = vsyncpa [#allocation4], 1
    %s483 = scalar_lea.sflag [#allocation4], 1
    %484 = vsyncpa %s483, 1

</llo_original>
